<compile_context>
chip_gen: v5e
topology: v5e:2x2
jax: 0.10.0
libtpu: 0.0.40
codegen_flags: <defaults>
</compile_context>

<pallas_src>
import functools

import jax
import jax.numpy as jnp
from jax.experimental import pallas as pl
from jax.experimental.pallas import tpu as pltpu

_MIB = 1024 * 1024


def _round_up(x, m):
    return (x + m - 1) // m * m


def _ffn_kernel(x_ref, w1_ref, w2_ref, o_ref, *scratch, inter_dtype):
    # x_ref  : (tm, d_model)   token tile (resident across the f axis)
    # w1_ref : (d_model, tf)   d_ff-tile of W1
    # w2_ref : (tf, d_model)   d_ff-tile of W2
    # o_ref  : (tm, d_model)   output tile (resident across the f axis)
    # scratch: optional (tm, d_model) f32 accumulator (only for non-f32 outputs)
    f = pl.program_id(1)
    acc_ref = scratch[0] if scratch else o_ref

    @pl.when(f == 0)
    def _():
        acc_ref[...] = jnp.zeros_like(acc_ref)

    # First matmul + ReLU on this d_ff tile. The MXU accumulates in f32 internally;
    # inter_dtype (bf16 on v6e/v7x) only controls the materialized intermediate.
    h = jnp.dot(x_ref[...], w1_ref[...], preferred_element_type=inter_dtype)
    h = jnp.maximum(h, 0.0)

    # Second matmul: accumulate the partial product in f32.
    acc_ref[...] += jnp.dot(
        h.astype(w2_ref.dtype), w2_ref[...],
        preferred_element_type=jnp.float32).astype(acc_ref.dtype)

    if scratch:
        @pl.when(f == pl.num_programs(1) - 1)
        def _():
            o_ref[...] = acc_ref[...].astype(o_ref.dtype)


def _chip_config():
    """Best-effort TPU generation / VMEM query (trace-time, Python-level)."""
    kind = ""
    try:
        kind = jax.devices()[0].device_kind.lower()
    except Exception:
        pass
    if "v7" in kind or "tpu7" in kind:
        gen = "v7x"
    elif "v6" in kind:
        gen = "v6e"
    elif "v5 lite" in kind or "v5e" in kind or "v5litepod" in kind:
        gen = "v5e"
    else:
        gen = "other"
    vmem_bytes = None
    try:
        vmem_bytes = int(pltpu.get_tpu_info().vmem_capacity_bytes)
    except Exception:
        vmem_bytes = None
    if not vmem_bytes or vmem_bytes <= 0:
        vmem_bytes = 64 * _MIB if gen == "v7x" else 128 * _MIB
    num_tc = 2 if gen == "v7x" else 1  # grid-sharding TensorCores per device
    return gen, vmem_bytes, num_tc


def _vmem_estimate(bm, bf, d_model, c_bytes, o_bytes, i_bytes, out_bufs, use_acc):
    x_win = 2 * bm * d_model * c_bytes           # double-buffered input window
    w1_win = 2 * d_model * bf * c_bytes
    w2_win = 2 * bf * d_model * c_bytes
    out_win = out_bufs * bm * d_model * o_bytes
    acc = bm * d_model * 4 if use_acc else 0
    h = bm * bf * i_bytes                        # materialized intermediate
    return x_win + w1_win + w2_win + out_win + acc + h


@functools.partial(jax.jit, static_argnames=("block_m", "block_f", "compute_dtype"))
def ffn_forward(x, w1, w2, *, block_m=None, block_f=None, compute_dtype=None):
    """x: [batch, seq, d_model]; w1: [d_model, d_ff]; w2: [d_ff, d_model].

    compute_dtype=None -> use w1.dtype (store the weights pre-cast, e.g. bf16, to
    avoid a per-call HBM pass re-casting W1/W2).
    """
    orig_dtype = x.dtype
    batch, seq, d_model = x.shape
    d_ff = w1.shape[1]
    M = batch * seq

    gen, vmem_phys, num_tc = _chip_config()

    if compute_dtype is None:
        compute_dtype = w1.dtype
    compute_dtype = jnp.dtype(compute_dtype)
    c_bytes = compute_dtype.itemsize
    o_bytes = jnp.dtype(orig_dtype).itemsize

    # bf16 packs 16 rows per vreg sublane-wise; keep block_m aligned to it.
    m_align = max(8, 32 // max(c_bytes, 1))

    # Generation-aware defaults (block_m sets FLOPs per streamed weight byte).
    if block_m is None:
        block_m = {"v5e": 512, "v6e": 1024, "v7x": 768}.get(gen, 512)
    if block_f is None:
        block_f = 512

    block_m = min(block_m, _round_up(M, m_align))
    if num_tc > 1 and M > m_align:
        # Keep >= 2 M tiles so the "parallel" axis shards over both v7x TensorCores.
        block_m = min(block_m, _round_up(pl.cdiv(M, num_tc), m_align))
    block_m = max(m_align, _round_up(block_m, m_align))

    if block_f >= d_ff:
        block_f = d_ff
    else:
        block_f = _round_up(block_f, 128)

    # Intermediate dtype: bf16 on v6e/v7x (MXU still accumulates in f32), f32 on v5e.
    if c_bytes <= 2 and gen in ("v6e", "v7x"):
        inter_dtype = compute_dtype
    else:
        inter_dtype = jnp.dtype(jnp.float32)
    i_bytes = inter_dtype.itemsize

    # f32 outputs accumulate directly into the resident output block (no scratch).
    use_acc = jnp.dtype(orig_dtype) != jnp.dtype(jnp.float32)

    # Output block is written once per M tile: single-buffer it on v7x to save VMEM.
    single_buffer_out = (gen == "v7x") and hasattr(pl, "Buffered")
    out_bufs = 1 if single_buffer_out else 2

    # VMEM budget: fit the actual windows, leave headroom for Mosaic internal scratch.
    if gen == "v7x":
        budget = vmem_phys - 8 * _MIB
    else:
        budget = min(112 * _MIB, vmem_phys - 16 * _MIB)
    budget = max(budget, 16 * _MIB)

    def est(bm, bf):
        return _vmem_estimate(bm, bf, d_model, c_bytes, o_bytes, i_bytes,
                              out_bufs, use_acc)

    # Shrink block_f first (doesn't change arithmetic intensity), then block_m.
    while est(block_m, block_f) > budget and block_f > 128:
        block_f = max(128, _round_up(block_f // 2, 128))
    while est(block_m, block_f) > budget and block_m > m_align:
        block_m = max(m_align, _round_up(block_m // 2, m_align))

    need = est(block_m, block_f)
    vmem_limit = int(min(budget, need + max(need // 4, 4 * _MIB)))
    vmem_limit = max(vmem_limit, 16 * _MIB)

    M_pad = _round_up(M, block_m)
    F_pad = _round_up(d_ff, block_f)

    # Cast/pad only when needed; zero padding is exact (padded tokens are sliced off;
    # padded d_ff columns/rows contribute relu(0) @ 0 = 0 to the accumulator).
    x2d = x.reshape(M, d_model)
    if x2d.dtype != compute_dtype:
        x2d = x2d.astype(compute_dtype)
    w1c = w1 if w1.dtype == compute_dtype else w1.astype(compute_dtype)
    w2c = w2 if w2.dtype == compute_dtype else w2.astype(compute_dtype)
    if M_pad != M:
        x2d = jnp.pad(x2d, ((0, M_pad - M), (0, 0)))
    if F_pad != d_ff:
        w1c = jnp.pad(w1c, ((0, 0), (0, F_pad - d_ff)))
        w2c = jnp.pad(w2c, ((0, F_pad - d_ff), (0, 0)))

    grid = (M_pad // block_m, F_pad // block_f)

    out_spec = pl.BlockSpec((block_m, d_model), lambda i, f: (i, 0))
    if single_buffer_out:
        try:
            out_spec = pl.BlockSpec((block_m, d_model), lambda i, f: (i, 0),
                                    pipeline_mode=pl.Buffered(1))
        except TypeError:
            pass  # older jax: keep the default double-buffered output

    scratch_shapes = []
    if use_acc:
        scratch_shapes = [pltpu.VMEM((block_m, d_model), jnp.float32)]

    kernel = functools.partial(_ffn_kernel, inter_dtype=inter_dtype)

    out2d = pl.pallas_call(
        kernel,
        out_shape=jax.ShapeDtypeStruct((M_pad, d_model), orig_dtype),
        grid_spec=pltpu.PrefetchScalarGridSpec(
            num_scalar_prefetch=0,
            grid=grid,
            in_specs=[
                pl.BlockSpec((block_m, d_model), lambda i, f: (i, 0)),
                pl.BlockSpec((d_model, block_f), lambda i, f: (0, f)),
                pl.BlockSpec((block_f, d_model), lambda i, f: (f, 0)),
            ],
            out_specs=out_spec,
            scratch_shapes=scratch_shapes,
        ),
        compiler_params=pltpu.CompilerParams(
            dimension_semantics=("parallel", "arbitrary"),
            vmem_limit_bytes=vmem_limit,
        ),
    )(x2d, w1c, w2c)

    if M_pad != M:
        out2d = out2d[:M]
    return out2d.reshape(batch, seq, d_model)


def init_ffn_params(key, d_model, d_ff, dtype=jnp.float32):
    """Mirror nn.Linear's kaiming-uniform init (bound = 1/sqrt(fan_in)).

    PyTorch Linear weight is [out, in]; we store the transpose [in, out] so the
    kernel uses x @ W directly. Pass dtype=jnp.bfloat16 to pre-cast the weights once
    (avoids the per-call cast on the memory-bound weight stream).
    """
    k1, k2 = jax.random.split(key)
    b1 = 1.0 / (d_model ** 0.5)
    b2 = 1.0 / (d_ff ** 0.5)
    w1 = jax.random.uniform(k1, (d_model, d_ff), jnp.float32, -b1, b1).astype(dtype)
    w2 = jax.random.uniform(k2, (d_ff, d_model), jnp.float32, -b2, b2).astype(dtype)
    return w1, w2


if __name__ == "__main__":
    # Small but layout-realistic shapes: d_model is a full lane tile (128), d_ff is
    # not a multiple of the f-tile, batch*seq is not a multiple of the m-tile, so the
    # padding + multi-tile accumulation + both accumulator paths are all exercised.
    d_model, d_ff = 128, 384
    batch, seq = 2, 9

    key = jax.random.PRNGKey(0)
    kx, kp = jax.random.split(key)
    x = jax.random.normal(kx, (batch, seq, d_model), dtype=jnp.float32)
    w1, w2 = init_ffn_params(kp, d_model, d_ff, dtype=jnp.float32)

    ref = jnp.maximum(x @ w1, 0.0) @ w2

    # 1) f32 weights, default (generation-aware) tiles: exact path, direct
    #    accumulation into the resident f32 output block (no scratch).
    out = ffn_forward(x, w1, w2)
    jax.block_until_ready(out)
    assert out.shape == (batch, seq, d_model)
    assert jnp.allclose(out, ref, atol=1e-4, rtol=1e-4), (
        float(jnp.max(jnp.abs(out - ref))))

    # 2) Explicit small f-tile: exercises d_ff padding + multi-f-tile accumulation.
    out_t = ffn_forward(x, w1, w2, block_m=128, block_f=256)
    jax.block_until_ready(out_t)
    assert jnp.allclose(out_t, ref, atol=1e-4, rtol=1e-4), (
        float(jnp.max(jnp.abs(out_t - ref))))

    # 3) Pre-cast bf16 weights (no per-call weight cast), bf16 intermediate on
    #    v6e/v7x, f32 output (direct accumulation). Compare vs bf16-rounded reference.
    w1b = w1.astype(jnp.bfloat16)
    w2b = w2.astype(jnp.bfloat16)
    out_b = ffn_forward(x, w1b, w2b)
    jax.block_until_ready(out_b)
    xb = x.astype(jnp.bfloat16).astype(jnp.float32)
    ref_b = jnp.maximum(xb @ w1b.astype(jnp.float32), 0.0) @ w2b.astype(jnp.float32)
    assert jnp.allclose(out_b, ref_b, atol=5e-2, rtol=5e-2), (
        float(jnp.max(jnp.abs(out_b - ref_b))))

    # 4) bf16 activations + bf16 output: exercises the f32 scratch-accumulator path
    #    and the 16-row sublane alignment for bf16 blocks.
    out_bb = ffn_forward(x.astype(jnp.bfloat16), w1b, w2b)
    jax.block_until_ready(out_bb)
    assert out_bb.dtype == jnp.bfloat16
    assert jnp.allclose(out_bb.astype(jnp.float32), ref_b, atol=1e-1, rtol=1e-1), (
        float(jnp.max(jnp.abs(out_bb.astype(jnp.float32) - ref_b))))

    print("KERNEL_OK")
</pallas_src>

<mosaic_0001>
module attributes {stable_mosaic.version = 11 : i64} {
  func.func @_ffn_kernel(%arg0: i32, %arg1: i32, %arg2: memref<24x128xf32, #tpu.memory_space<vmem>>, %arg3: memref<128x384xf32, #tpu.memory_space<vmem>>, %arg4: memref<384x128xf32, #tpu.memory_space<vmem>>, %arg5: memref<24x128xf32, #tpu.memory_space<vmem>>) attributes {dimension_semantics = [#tpu.dimension_semantics<parallel>, #tpu.dimension_semantics<arbitrary>], iteration_bounds = array<i64: 1, 1>, scalar_prefetch = 0 : i64, scratch_operands = 0 : i64, tpu.core_type = #tpu.core_type<tc>, window_params = [{transform_indices = @transform_0, window_bounds = array<i64: 24, 128>}, {transform_indices = @transform_1, window_bounds = array<i64: 128, 384>}, {transform_indices = @transform_2, window_bounds = array<i64: 384, 128>}, {transform_indices = @transform_3, window_bounds = array<i64: 24, 128>}]} {
    %c0_i32 = arith.constant 0 : i32
    %0 = arith.cmpi eq, %arg1, %c0_i32 : i32
    %1 = arith.extui %0 : i1 to i32
    %c0_i32_0 = arith.constant 0 : i32
    %2 = arith.cmpi ne, %1, %c0_i32_0 : i32
    scf.if %2 {
      %cst_12 = arith.constant 0.000000e+00 : f32
      %13 = vector.broadcast %cst_12 : f32 to vector<24x128xf32>
      %c0_13 = arith.constant 0 : index
      %c0_14 = arith.constant 0 : index
      %14 = vector.load %arg5[%c0_13, %c0_14] : memref<24x128xf32, #tpu.memory_space<vmem>>, vector<24x128xf32>
      tpu.vector_store %arg5[%c0_13, %c0_14], %13 {strides = array<i32>} : memref<24x128xf32, #tpu.memory_space<vmem>>, vector<24x128xf32>,
    } else {
    }
    %c0 = arith.constant 0 : index
    %c0_1 = arith.constant 0 : index
    %3 = vector.load %arg2[%c0, %c0_1] : memref<24x128xf32, #tpu.memory_space<vmem>>, vector<24x128xf32>
    %c0_2 = arith.constant 0 : index
    %c0_3 = arith.constant 0 : index
    %4 = vector.load %arg3[%c0_2, %c0_3] : memref<128x384xf32, #tpu.memory_space<vmem>>, vector<128x384xf32>
    %cst = arith.constant dense<0.000000e+00> : vector<24x384xf32>
    %5 = tpu.matmul %3, %4, %cst {dimension_numbers = #tpu.dot_dimension_numbers<[1], [0], [0], [1], [0, 0, 1, 1], [], []>} : vector<24x128xf32>, vector<128x384xf32>, vector<24x384xf32> -> vector<24x384xf32>
    %cst_4 = arith.constant 0.000000e+00 : f32
    %6 = vector.broadcast %cst_4 : f32 to vector<24x384xf32>
    %7 = arith.maximumf %5, %6 : vector<24x384xf32>
    %c0_5 = arith.constant 0 : index
    %c0_6 = arith.constant 0 : index
    %8 = vector.load %arg5[%c0_5, %c0_6] : memref<24x128xf32, #tpu.memory_space<vmem>>, vector<24x128xf32>
    %c0_7 = arith.constant 0 : index
    %c0_8 = arith.constant 0 : index
    %9 = vector.load %arg4[%c0_7, %c0_8] : memref<384x128xf32, #tpu.memory_space<vmem>>, vector<384x128xf32>
    %cst_9 = arith.constant dense<0.000000e+00> : vector<24x128xf32>
    %10 = tpu.matmul %7, %9, %cst_9 {dimension_numbers = #tpu.dot_dimension_numbers<[1], [0], [0], [1], [0, 0, 1, 1], [], []>} : vector<24x384xf32>, vector<384x128xf32>, vector<24x128xf32> -> vector<24x128xf32>
    %11 = arith.addf %8, %10 : vector<24x128xf32>
    %c0_10 = arith.constant 0 : index
    %c0_11 = arith.constant 0 : index
    %12 = vector.load %arg5[%c0_10, %c0_11] : memref<24x128xf32, #tpu.memory_space<vmem>>, vector<24x128xf32>
    tpu.vector_store %arg5[%c0_10, %c0_11], %11 {strides = array<i32>} : memref<24x128xf32, #tpu.memory_space<vmem>>, vector<24x128xf32>,
    return
  }
  func.func @transform_0(%arg0: i32, %arg1: i32) -> (i32, i32) {
    %c0_i32 = arith.constant 0 : i32
    %c0_i32_0 = arith.constant 0 : i32
    return %arg0, %c0_i32 : i32, i32
  }
  func.func @transform_1(%arg0: i32, %arg1: i32) -> (i32, i32) {
    %c0_i32 = arith.constant 0 : i32
    %c0_i32_0 = arith.constant 0 : i32
    return %c0_i32, %arg1 : i32, i32
  }
  func.func @transform_2(%arg0: i32, %arg1: i32) -> (i32, i32) {
    %c0_i32 = arith.constant 0 : i32
    %c0_i32_0 = arith.constant 0 : i32
    return %arg1, %c0_i32 : i32, i32
  }
  func.func @transform_3(%arg0: i32, %arg1: i32) -> (i32, i32) {
    %c0_i32 = arith.constant 0 : i32
    %c0_i32_0 = arith.constant 0 : i32
    return %arg0, %c0_i32 : i32, i32
  }
}

</mosaic_0001>

<llo_original>
// kernel: ffn_forward.1
$region0: #{ffn_forward.1}
  #allocation0 [shape = 'u32[]', space=smem, size = 0x4, offset = 0x4, fixed_abs, tag = 'smem constant byte address 0x4 - core index']
  #allocation1 [shape = 'u32[72,128]{1,0:T(1,128)}', space=vmem, size = 0x9000, scoped, tag = 'internal scratch']
  %s0 = inlined_call_operand.vmem [shape: f32[24,128], index: 0, kind: input, shape index: {}]
  %s1 = inlined_call_operand.hbm [shape: f32[128,384], index: 1, kind: input, shape index: {}]
  %s2 = inlined_call_operand.hbm [shape: f32[384,128], index: 2, kind: input, shape index: {}]
  %s3 = inlined_call_operand.vmem [shape: f32[24,128], index: 3, kind: output, shape index: {}]
  %s4 = sld [smem:[#allocation0]]
  $region34: #{ffn_forward.1} parent=0
    _
  %s6 = ssub.s32 1, %s4
  %s7 = scalar_select 0, %s6, %s4
  $region1: #{ffn_forward.1} parent=0
    #allocation2 [shape = 'u8[196608]{0}', space=vmem, size = 0x30000, scoped, tag = 'input window, operand 1, single buffered']
    #allocation3 [shape = 's32[1]{0}', space=sflag, size = 0x4, scoped, tag = 'scoped memory for ffn_forward.1']
    #allocation4 [shape = 'u8[196608]{0}', space=vmem, size = 0x30000, scoped, tag = 'input window, operand 2, single buffered']
    #allocation5 [shape = 's32[1]{0}', space=sflag, size = 0x4, scoped, tag = 'scoped memory for ffn_forward.1']
    %8 = vsyncpa [#allocation3], 0
    %9 = vsyncpa [#allocation5], 0
    // Predicated region
    $region2: #{ffn_forward.1} parent=1 // pred_check
      _
    $region3: #{ffn_forward.1} parent=1 // pred_check_branch
      %11 = sbr.rel (0) target = $region5
    $region4: #{ffn_forward.1} parent=1 // pred_region
      _
    $region5: #{ffn_forward.1} parent=1 // pred_fallthru
      _
    // Predicated region
    $region6: #{ffn_forward.1} parent=1 // pred_check
      _
    $region7: #{ffn_forward.1} parent=1 // pred_check_branch
      %13 = sbr.rel (0) target = $region9
    $region8: #{ffn_forward.1} parent=1 // pred_region
      %15 = vsyncadd [#allocation3], 0
      %s16 = sshll.u32 %s1, 4
      %s17 = int_to_ptr.hbm [resolvable:$true] %s16
      %s18 = sshll.u32 [#allocation2], 4
      %s19 = int_to_ptr.vmem [resolvable:$true] %s18
      %24 = dma.hbm_to_vmem [thread:$0]  %s17, 6144, %s19, [#allocation3], 384, 384, 24
    $region9: #{ffn_forward.1} parent=1 // pred_fallthru
      _
    // Predicated region
    $region10: #{ffn_forward.1} parent=1 // pred_check
      _
    $region11: #{ffn_forward.1} parent=1 // pred_check_branch
      %26 = sbr.rel (0) target = $region13
    $region12: #{ffn_forward.1} parent=1 // pred_region
      %28 = vsyncadd [#allocation5], 0
      %s29 = sshll.u32 %s2, 4
      %s30 = int_to_ptr.hbm [resolvable:$true] %s29
      %s31 = sshll.u32 [#allocation4], 4
      %s32 = int_to_ptr.vmem [resolvable:$true] %s31
      %37 = dma.hbm_to_vmem [thread:$0]  %s30, 6144, %s32, [#allocation5], 128, 128, 8
    $region13: #{ffn_forward.1} parent=1 // pred_fallthru
      _
    // Predicated region
    $region14: #{ffn_forward.1} parent=1 // pred_check
      _
    $region15: #{ffn_forward.1} parent=1 // pred_check_branch
      %39 = sbr.rel (0) target = $region17
    $region16: #{ffn_forward.1} parent=1 // pred_region
      %41 = dma.done [#allocation3], 6144
    $region17: #{ffn_forward.1} parent=1 // pred_fallthru
      _
    // Predicated region
    $region18: #{ffn_forward.1} parent=1 // pred_check
      _
    $region19: #{ffn_forward.1} parent=1 // pred_check_branch
      %43 = sbr.rel (0) target = $region21
    $region20: #{ffn_forward.1} parent=1 // pred_region
      %45 = dma.done [#allocation5], 6144
    $region21: #{ffn_forward.1} parent=1 // pred_fallthru
      _
    %p46 = scmp.eq.s32.totalorder 0, 0
    // Predicated region
    $region22: #{ffn_forward.1} parent=1 // pred_check
      %p47 = pneg %p46
    $region23: #{ffn_forward.1} parent=1 // pred_check_branch
      %49 = sbr.rel (%p47) target = $region25
    $region24: #{ffn_forward.1} parent=1 // pred_region
      %50 = vst [vmem:[%s3] sm:$0xff] 0.0
      %51 = vst [vmem:[%s3 + $0x8] sm:$0xff] 0.0
      %52 = vst [vmem:[%s3 + $0x10] sm:$0xff] 0.0
    $region25: #{ffn_forward.1} parent=1 // pred_fallthru
      _
    %v53 = vld [vmem:[%s0] sm:$0xff]
    %v54 = vld [vmem:[%s0 + $0x8] sm:$0xff]
    %v55 = vld [vmem:[%s0 + $0x10] sm:$0xff]
    %v56 = vld [vmem:[#allocation2] sm:$0xff]
    %v57 = vld [vmem:[#allocation2 + $0x8] sm:$0xff]
    %v58 = vld [vmem:[#allocation2 + $0x10] sm:$0xff]
    %v59 = vld [vmem:[#allocation2 + $0x18] sm:$0xff]
    %v60 = vld [vmem:[#allocation2 + $0x20] sm:$0xff]
    %v61 = vld [vmem:[#allocation2 + $0x28] sm:$0xff]
    %v62 = vld [vmem:[#allocation2 + $0x30] sm:$0xff]
    %v63 = vld [vmem:[#allocation2 + $0x38] sm:$0xff]
    %v64 = vld [vmem:[#allocation2 + $0x40] sm:$0xff]
    %v65 = vld [vmem:[#allocation2 + $0x48] sm:$0xff]
    %v66 = vld [vmem:[#allocation2 + $0x50] sm:$0xff]
    %v67 = vld [vmem:[#allocation2 + $0x58] sm:$0xff]
    %v68 = vld [vmem:[#allocation2 + $0x60] sm:$0xff]
    %v69 = vld [vmem:[#allocation2 + $0x68] sm:$0xff]
    %v70 = vld [vmem:[#allocation2 + $0x70] sm:$0xff]
    %v71 = vld [vmem:[#allocation2 + $0x78] sm:$0xff]
    %v72 = vld [vmem:[#allocation2 + $0x80] sm:$0xff]
    %v73 = vld [vmem:[#allocation2 + $0x88] sm:$0xff]
    %v74 = vld [vmem:[#allocation2 + $0x90] sm:$0xff]
    %v75 = vld [vmem:[#allocation2 + $0x98] sm:$0xff]
    %v76 = vld [vmem:[#allocation2 + $0xa0] sm:$0xff]
    %v77 = vld [vmem:[#allocation2 + $0xa8] sm:$0xff]
    %v78 = vld [vmem:[#allocation2 + $0xb0] sm:$0xff]
    %v79 = vld [vmem:[#allocation2 + $0xb8] sm:$0xff]
    %v80 = vld [vmem:[#allocation2 + $0xc0] sm:$0xff]
    %v81 = vld [vmem:[#allocation2 + $0xc8] sm:$0xff]
    %v82 = vld [vmem:[#allocation2 + $0xd0] sm:$0xff]
    %v83 = vld [vmem:[#allocation2 + $0xd8] sm:$0xff]
    %v84 = vld [vmem:[#allocation2 + $0xe0] sm:$0xff]
    %v85 = vld [vmem:[#allocation2 + $0xe8] sm:$0xff]
    %v86 = vld [vmem:[#allocation2 + $0xf0] sm:$0xff]
    %v87 = vld [vmem:[#allocation2 + $0xf8] sm:$0xff]
    %v88 = vld [vmem:[#allocation2 + $0x100] sm:$0xff]
    %v89 = vld [vmem:[#allocation2 + $0x108] sm:$0xff]
    %v90 = vld [vmem:[#allocation2 + $0x110] sm:$0xff]
    %v91 = vld [vmem:[#allocation2 + $0x118] sm:$0xff]
    %v92 = vld [vmem:[#allocation2 + $0x120] sm:$0xff]
    %v93 = vld [vmem:[#allocation2 + $0x128] sm:$0xff]
    %v94 = vld [vmem:[#allocation2 + $0x130] sm:$0xff]
    %v95 = vld [vmem:[#allocation2 + $0x138] sm:$0xff]
    %v96 = vld [vmem:[#allocation2 + $0x140] sm:$0xff]
    %v97 = vld [vmem:[#allocation2 + $0x148] sm:$0xff]
    %v98 = vld [vmem:[#allocation2 + $0x150] sm:$0xff]
    %v99 = vld [vmem:[#allocation2 + $0x158] sm:$0xff]
    %v100 = vld [vmem:[#allocation2 + $0x160] sm:$0xff]
    %v101 = vld [vmem:[#allocation2 + $0x168] sm:$0xff]
    %v102 = vld [vmem:[#allocation2 + $0x170] sm:$0xff]
    %v103 = vld [vmem:[#allocation2 + $0x178] sm:$0xff]
    %104 = vmatpush.msra.mxu0 %v101
    %105 = vmatpush.msra.mxu0 %v98
    %106 = vmatpush.msra.mxu0 %v95
    %107 = vmatpush.msra.mxu0 %v92
    %108 = vmatpush.msra.mxu0 %v89
    %109 = vmatpush.msra.mxu0 %v86
    %110 = vmatpush.msra.mxu0 %v83
    %111 = vmatpush.msra.mxu0 %v80
    %112 = vmatpush.msra.mxu0 %v77
    %113 = vmatpush.msra.mxu0 %v74
    %114 = vmatpush.msra.mxu0 %v71
    %115 = vmatpush.msra.mxu0 %v68
    %116 = vmatpush.msra.mxu0 %v65
    %117 = vmatpush.msra.mxu0 %v62
    %118 = vmatpush.msra.mxu0 %v59
    %119 = vmatpush.msra.mxu0 %v56
    %120 = vmatmul.f32.gmra.mxu0 %v53
    %v121 = vpop.f32.mrf.mxu0
    %v122 = vadd.f32 0.0, %v121
    %123 = vmatmul.f32.gmra.mxu0 %v54
    %v124 = vpop.f32.mrf.mxu0
    %v125 = vadd.f32 0.0, %v124
    %126 = vmatmul.f32.gmra.mxu0 %v55
    %v127 = vpop.f32.mrf.mxu0
    %v128 = vadd.f32 0.0, %v127
    %129 = vdwg.mxu0
    %130 = vmatpush.msra.mxu0 %v102
    %131 = vmatpush.msra.mxu0 %v99
    %132 = vmatpush.msra.mxu0 %v96
    %133 = vmatpush.msra.mxu0 %v93
    %134 = vmatpush.msra.mxu0 %v90
    %135 = vmatpush.msra.mxu0 %v87
    %136 = vmatpush.msra.mxu0 %v84
    %137 = vmatpush.msra.mxu0 %v81
    %138 = vmatpush.msra.mxu0 %v78
    %139 = vmatpush.msra.mxu0 %v75
    %140 = vmatpush.msra.mxu0 %v72
    %141 = vmatpush.msra.mxu0 %v69
    %142 = vmatpush.msra.mxu0 %v66
    %143 = vmatpush.msra.mxu0 %v63
    %144 = vmatpush.msra.mxu0 %v60
    %145 = vmatpush.msra.mxu0 %v57
    %146 = vmatmul.f32.gmra.mxu0 %v53
    %v147 = vpop.f32.mrf.mxu0
    %v148 = vadd.f32 0.0, %v147
    %149 = vmatmul.f32.gmra.mxu0 %v54
    %v150 = vpop.f32.mrf.mxu0
    %v151 = vadd.f32 0.0, %v150
    %152 = vmatmul.f32.gmra.mxu0 %v55
    %v153 = vpop.f32.mrf.mxu0
    %v154 = vadd.f32 0.0, %v153
    %155 = vdwg.mxu0
    %156 = vmatpush.msra.mxu0 %v103
    %157 = vmatpush.msra.mxu0 %v100
    %158 = vmatpush.msra.mxu0 %v97
    %159 = vmatpush.msra.mxu0 %v94
    %160 = vmatpush.msra.mxu0 %v91
    %161 = vmatpush.msra.mxu0 %v88
    %162 = vmatpush.msra.mxu0 %v85
    %163 = vmatpush.msra.mxu0 %v82
    %164 = vmatpush.msra.mxu0 %v79
    %165 = vmatpush.msra.mxu0 %v76
    %166 = vmatpush.msra.mxu0 %v73
    %167 = vmatpush.msra.mxu0 %v70
    %168 = vmatpush.msra.mxu0 %v67
    %169 = vmatpush.msra.mxu0 %v64
    %170 = vmatpush.msra.mxu0 %v61
    %171 = vmatpush.msra.mxu0 %v58
    %172 = vmatmul.f32.gmra.mxu0 %v53
    %v173 = vpop.f32.mrf.mxu0
    %v174 = vadd.f32 0.0, %v173
    %175 = vmatmul.f32.gmra.mxu0 %v54
    %v176 = vpop.f32.mrf.mxu0
    %v177 = vadd.f32 0.0, %v176
    %178 = vmatmul.f32.gmra.mxu0 %v55
    %v179 = vpop.f32.mrf.mxu0
    %v180 = vadd.f32 0.0, %v179
    %181 = vdwg.mxu0
    %v182 = vmax.f32 %v122, 0.0
    %v183 = vmax.f32 %v148, 0.0
    %v184 = vmax.f32 %v174, 0.0
    %v185 = vmax.f32 %v125, 0.0
    %v186 = vmax.f32 %v151, 0.0
    %v187 = vmax.f32 %v177, 0.0
    %v188 = vmax.f32 %v128, 0.0
    %v189 = vmax.f32 %v154, 0.0
    %v190 = vmax.f32 %v180, 0.0
    %v191 = vld [vmem:[%s3] sm:$0xff]
    %v192 = vld [vmem:[%s3 + $0x8] sm:$0xff]
    %v193 = vld [vmem:[%s3 + $0x10] sm:$0xff]
    %v194 = vld [vmem:[#allocation4] sm:$0xff]
    %v195 = vld [vmem:[#allocation4 + $0x8] sm:$0xff]
    %v196 = vld [vmem:[#allocation4 + $0x10] sm:$0xff]
    %v197 = vld [vmem:[#allocation4 + $0x18] sm:$0xff]
    %v198 = vld [vmem:[#allocation4 + $0x20] sm:$0xff]
    %v199 = vld [vmem:[#allocation4 + $0x28] sm:$0xff]
    %v200 = vld [vmem:[#allocation4 + $0x30] sm:$0xff]
    %v201 = vld [vmem:[#allocation4 + $0x38] sm:$0xff]
    %v202 = vld [vmem:[#allocation4 + $0x40] sm:$0xff]
    %v203 = vld [vmem:[#allocation4 + $0x48] sm:$0xff]
    %v204 = vld [vmem:[#allocation4 + $0x50] sm:$0xff]
    %v205 = vld [vmem:[#allocation4 + $0x58] sm:$0xff]
    %v206 = vld [vmem:[#allocation4 + $0x60] sm:$0xff]
    %v207 = vld [vmem:[#allocation4 + $0x68] sm:$0xff]
    %v208 = vld [vmem:[#allocation4 + $0x70] sm:$0xff]
    %v209 = vld [vmem:[#allocation4 + $0x78] sm:$0xff]
    %v210 = vld [vmem:[#allocation4 + $0x80] sm:$0xff]
    %v211 = vld [vmem:[#allocation4 + $0x88] sm:$0xff]
    %v212 = vld [vmem:[#allocation4 + $0x90] sm:$0xff]
    %v213 = vld [vmem:[#allocation4 + $0x98] sm:$0xff]
    %v214 = vld [vmem:[#allocation4 + $0xa0] sm:$0xff]
    %v215 = vld [vmem:[#allocation4 + $0xa8] sm:$0xff]
    %v216 = vld [vmem:[#allocation4 + $0xb0] sm:$0xff]
    %v217 = vld [vmem:[#allocation4 + $0xb8] sm:$0xff]
    %v218 = vld [vmem:[#allocation4 + $0xc0] sm:$0xff]
    %v219 = vld [vmem:[#allocation4 + $0xc8] sm:$0xff]
    %v220 = vld [vmem:[#allocation4 + $0xd0] sm:$0xff]
    %v221 = vld [vmem:[#allocation4 + $0xd8] sm:$0xff]
    %v222 = vld [vmem:[#allocation4 + $0xe0] sm:$0xff]
    %v223 = vld [vmem:[#allocation4 + $0xe8] sm:$0xff]
    %v224 = vld [vmem:[#allocation4 + $0xf0] sm:$0xff]
    %v225 = vld [vmem:[#allocation4 + $0xf8] sm:$0xff]
    %v226 = vld [vmem:[#allocation4 + $0x100] sm:$0xff]
    %v227 = vld [vmem:[#allocation4 + $0x108] sm:$0xff]
    %v228 = vld [vmem:[#allocation4 + $0x110] sm:$0xff]
    %v229 = vld [vmem:[#allocation4 + $0x118] sm:$0xff]
    %v230 = vld [vmem:[#allocation4 + $0x120] sm:$0xff]
    %v231 = vld [vmem:[#allocation4 + $0x128] sm:$0xff]
    %v232 = vld [vmem:[#allocation4 + $0x130] sm:$0xff]
    %v233 = vld [vmem:[#allocation4 + $0x138] sm:$0xff]
    %v234 = vld [vmem:[#allocation4 + $0x140] sm:$0xff]
    %v235 = vld [vmem:[#allocation4 + $0x148] sm:$0xff]
    %v236 = vld [vmem:[#allocation4 + $0x150] sm:$0xff]
    %v237 = vld [vmem:[#allocation4 + $0x158] sm:$0xff]
    %v238 = vld [vmem:[#allocation4 + $0x160] sm:$0xff]
    %v239 = vld [vmem:[#allocation4 + $0x168] sm:$0xff]
    %v240 = vld [vmem:[#allocation4 + $0x170] sm:$0xff]
    %v241 = vld [vmem:[#allocation4 + $0x178] sm:$0xff]
    %242 = vmatpush.msra.mxu0 %v209
    %243 = vmatpush.msra.mxu0 %v208
    %244 = vmatpush.msra.mxu0 %v207
    %245 = vmatpush.msra.mxu0 %v206
    %246 = vmatpush.msra.mxu0 %v205
    %247 = vmatpush.msra.mxu0 %v204
    %248 = vmatpush.msra.mxu0 %v203
    %249 = vmatpush.msra.mxu0 %v202
    %250 = vmatpush.msra.mxu0 %v201
    %251 = vmatpush.msra.mxu0 %v200
    %252 = vmatpush.msra.mxu0 %v199
    %253 = vmatpush.msra.mxu0 %v198
    %254 = vmatpush.msra.mxu0 %v197
    %255 = vmatpush.msra.mxu0 %v196
    %256 = vmatpush.msra.mxu0 %v195
    %257 = vmatpush.msra.mxu0 %v194
    %258 = vmatmul.f32.gmra.mxu0 %v182
    %v259 = vpop.f32.mrf.mxu0
    %v260 = vadd.f32 0.0, %v259
    %261 = vmatmul.f32.gmra.mxu0 %v185
    %v262 = vpop.f32.mrf.mxu0
    %v263 = vadd.f32 0.0, %v262
    %264 = vmatmul.f32.gmra.mxu0 %v188
    %v265 = vpop.f32.mrf.mxu0
    %v266 = vadd.f32 0.0, %v265
    %267 = vdwg.mxu0
    %268 = vmatpush.msra.mxu0 %v225
    %269 = vmatpush.msra.mxu0 %v224
    %270 = vmatpush.msra.mxu0 %v223
    %271 = vmatpush.msra.mxu0 %v222
    %272 = vmatpush.msra.mxu0 %v221
    %273 = vmatpush.msra.mxu0 %v220
    %274 = vmatpush.msra.mxu0 %v219
    %275 = vmatpush.msra.mxu0 %v218
    %276 = vmatpush.msra.mxu0 %v217
    %277 = vmatpush.msra.mxu0 %v216
    %278 = vmatpush.msra.mxu0 %v215
    %279 = vmatpush.msra.mxu0 %v214
    %280 = vmatpush.msra.mxu0 %v213
    %281 = vmatpush.msra.mxu0 %v212
    %282 = vmatpush.msra.mxu0 %v211
    %283 = vmatpush.msra.mxu0 %v210
    %284 = vmatmul.f32.gmra.mxu0 %v183
    %v285 = vpop.f32.mrf.mxu0
    %v286 = vadd.f32 %v260, %v285
    %287 = vmatmul.f32.gmra.mxu0 %v186
    %v288 = vpop.f32.mrf.mxu0
    %v289 = vadd.f32 %v263, %v288
    %290 = vmatmul.f32.gmra.mxu0 %v189
    %v291 = vpop.f32.mrf.mxu0
    %v292 = vadd.f32 %v266, %v291
    %293 = vdwg.mxu0
    %294 = vmatpush.msra.mxu0 %v241
    %295 = vmatpush.msra.mxu0 %v240
    %296 = vmatpush.msra.mxu0 %v239
    %297 = vmatpush.msra.mxu0 %v238
    %298 = vmatpush.msra.mxu0 %v237
    %299 = vmatpush.msra.mxu0 %v236
    %300 = vmatpush.msra.mxu0 %v235
    %301 = vmatpush.msra.mxu0 %v234
    %302 = vmatpush.msra.mxu0 %v233
    %303 = vmatpush.msra.mxu0 %v232
    %304 = vmatpush.msra.mxu0 %v231
    %305 = vmatpush.msra.mxu0 %v230
    %306 = vmatpush.msra.mxu0 %v229
    %307 = vmatpush.msra.mxu0 %v228
    %308 = vmatpush.msra.mxu0 %v227
    %309 = vmatpush.msra.mxu0 %v226
    %310 = vmatmul.f32.gmra.mxu0 %v184
    %v311 = vpop.f32.mrf.mxu0
    %v312 = vadd.f32 %v286, %v311
    %313 = vmatmul.f32.gmra.mxu0 %v187
    %v314 = vpop.f32.mrf.mxu0
    %v315 = vadd.f32 %v289, %v314
    %316 = vmatmul.f32.gmra.mxu0 %v190
    %v317 = vpop.f32.mrf.mxu0
    %v318 = vadd.f32 %v292, %v317
    %319 = vdwg.mxu0
    %v320 = vadd.f32 %v191, %v312
    %v321 = vadd.f32 %v192, %v315
    %v322 = vadd.f32 %v193, %v318
    %323 = vst [vmem:[%s3] sm:$0xff] %v320
    %324 = vst [vmem:[%s3 + $0x8] sm:$0xff] %v321
    %325 = vst [vmem:[%s3 + $0x10] sm:$0xff] %v322
    // Predicated region
    $region26: #{ffn_forward.1} parent=1 // pred_check
      _
    $region27: #{ffn_forward.1} parent=1 // pred_check_branch
      %327 = sbr.rel (0) target = $region29
    $region28: #{ffn_forward.1} parent=1 // pred_region
      _
    $region29: #{ffn_forward.1} parent=1 // pred_fallthru
      _
    // Predicated region
    $region30: #{ffn_forward.1} parent=1 // pred_check
      _
    $region31: #{ffn_forward.1} parent=1 // pred_check_branch
      %329 = sbr.rel (0) target = $region33
    $region32: #{ffn_forward.1} parent=1 // pred_region
      _
    $region33: #{ffn_forward.1} parent=1 // pred_fallthru
      _
    %330 = vsyncpa [#allocation3], 1
    %331 = vsyncpa [#allocation5], 1

</llo_original>
